<compile_context>
chip_gen: v7x
topology: tpu7x:2x2x1
jax: 0.10.0
libtpu: 0.0.40
codegen_flags: <defaults>
</compile_context>

<pallas_src>
import functools

import jax
import jax.numpy as jnp
from jax.experimental import pallas as pl
from jax.experimental.pallas import tpu as pltpu


def _round_up(x, m):
    return (x + m - 1) // m * m


def _cdiv(a, b):
    return (a + b - 1) // b


# ----------------------------------------------------------------------------
# Kernel
# ----------------------------------------------------------------------------
def _make_vae_kernel(n_hidden, input_dim, latent_dim):
    """Kernel closure.

    Weight-slab layout (first axis):
      [0, n_hidden)              : encoder Linear layers           (offset-0)
      n_hidden                   : fused mu/logvar head, columns [I, I+2L)
      [n_hidden+1, 2n_hidden+1)  : decoder Linear layers (first one has its
                                   latent rows at [I,I+L) duplicated to
                                   [I+L,I+2L))
      2n_hidden+1                : fc_out                          (offset-0)
    Bias slab has one extra row (index n_layers): the logvar-lane mask.
    """
    n_layers = 2 * n_hidden + 2
    head_idx = n_hidden
    out_idx = n_layers - 1
    mask_idx = n_layers
    lv_off = input_dim + latent_dim  # first logvar lane

    def kernel(x_ref, eps_ref, w_ref, b_ref, out_ref, xbuf, ebuf):
        # ---- zero-pad x into a lane-dense (tile_b, pad) VMEM buffer ----
        # (offset-0 masked store only; padded rows/lanes are exact zeros)
        xbuf[...] = jnp.zeros_like(xbuf)
        xbuf[:, :input_dim] = x_ref[...]

        # ---- encoder MLP: Linear + ReLU ----
        h = xbuf[...]
        for l in range(n_hidden):
            h = jnp.maximum(
                jnp.dot(h, w_ref[l], preferred_element_type=jnp.float32)
                + b_ref[l],
                0.0,
            )

        # ---- fused mu/logvar head, produced directly at OUTPUT lanes:
        #      mu in [I, I+L), logvar in [I+L, I+2L), zero elsewhere ----
        head = (
            jnp.dot(h, w_ref[head_idx], preferred_element_type=jnp.float32)
            + b_ref[head_idx]
        )

        # ---- reparameterize, select-free and cross-lane-free on the VPU ----
        # eps is lane-padded at [0, L) then rotated (XLU) to the logvar lanes.
        ebuf[...] = jnp.zeros_like(ebuf)
        ebuf[:, :latent_dim] = eps_ref[...]
        eps_wide = pltpu.roll(ebuf[...], shift=lv_off, axis=1)

        lv_mask = b_ref[mask_idx]          # (1, pad): 1.0 exactly on logvar lanes
        head_lv = head * lv_mask           # logvar on its lanes, 0 elsewhere
        std = jnp.exp(0.5 * head_lv)       # exp(.5*logvar) there, exactly 1 elsewhere
        # z: mu in [I,I+L), eps*std in [I+L,I+2L), 0 elsewhere.  The duplicated
        # rows of the first decoder weight make its matmul sum mu + eps*std.
        z = (head - head_lv) + eps_wide * std

        # ---- decoder MLP: Linear + ReLU ----
        for l in range(n_hidden):
            li = head_idx + 1 + l
            z = jnp.maximum(
                jnp.dot(z, w_ref[li], preferred_element_type=jnp.float32)
                + b_ref[li],
                0.0,
            )

        # ---- merged output: recon in [0,I), mu|logvar in [I, I+2L).
        #      disjoint lanes -> one add, one lane-dense full-width store ----
        recon = (
            jnp.dot(z, w_ref[out_idx], preferred_element_type=jnp.float32)
            + b_ref[out_idx]
        )
        out_ref[...] = recon + head

    return kernel


# ----------------------------------------------------------------------------
# Parameter init (PyTorch-style) and packing into lane-aligned slabs
# ----------------------------------------------------------------------------
def init_vae_params(key, input_dim, hidden_sizes, latent_dim):
    """PyTorch-style uniform(+/- 1/sqrt(fan_in)) init.

    Returns list of (w [in, out], b [out]) in the order:
      enc_0..enc_{n-1}, fc_mu, fc_logvar, dec_0..dec_{n-1}, fc_out
    """

    def linear(k, in_dim, out_dim):
        kw, kb = jax.random.split(k)
        bound = 1.0 / (in_dim ** 0.5)
        w = jax.random.uniform(kw, (in_dim, out_dim), jnp.float32, -bound, bound)
        b = jax.random.uniform(kb, (out_dim,), jnp.float32, -bound, bound)
        return w, b

    n_hidden = len(hidden_sizes)
    keys = jax.random.split(key, 2 * n_hidden + 3)
    ki = 0
    layers = []
    in_dim = input_dim
    for h in hidden_sizes:                                   # encoders
        layers.append(linear(keys[ki], in_dim, h)); ki += 1
        in_dim = h
    layers.append(linear(keys[ki], hidden_sizes[-1], latent_dim)); ki += 1  # fc_mu
    layers.append(linear(keys[ki], hidden_sizes[-1], latent_dim)); ki += 1  # fc_logvar
    in_dim = latent_dim
    for h in reversed(hidden_sizes):                         # decoders
        layers.append(linear(keys[ki], in_dim, h)); ki += 1
        in_dim = h
    layers.append(linear(keys[ki], hidden_sizes[0], input_dim)); ki += 1    # fc_out
    return layers


def pack_vae_params(layers, input_dim, hidden_sizes, latent_dim):
    """Pack per-layer params into zero-padded, lane-aligned slabs (see kernel)."""
    n_hidden = len(hidden_sizes)
    n_layers = 2 * n_hidden + 2
    max_dim = max(max(w.shape[0], w.shape[1]) for w, _ in layers)
    pad = _round_up(max(128, max_dim, input_dim + 2 * latent_dim), 128)

    w_slab = jnp.zeros((n_layers, pad, pad), jnp.float32)
    b_slab = jnp.zeros((n_layers + 1, 1, pad), jnp.float32)

    def put(ws, bs, idx, w, b, row_off=0, col_off=0):
        ws = ws.at[idx, row_off:row_off + w.shape[0],
                   col_off:col_off + w.shape[1]].set(w)
        bs = bs.at[idx, 0, col_off:col_off + b.shape[0]].set(b)
        return ws, bs

    # encoders (offset 0)
    for l in range(n_hidden):
        w, b = layers[l]
        w_slab, b_slab = put(w_slab, b_slab, l, w, b)

    # fused mu/logvar head -> columns [I, I+2L)
    (w_mu, b_mu), (w_lv, b_lv) = layers[n_hidden], layers[n_hidden + 1]
    w_head = jnp.concatenate([w_mu, w_lv], axis=1)
    b_head = jnp.concatenate([b_mu, b_lv], axis=0)
    w_slab, b_slab = put(w_slab, b_slab, n_hidden, w_head, b_head,
                         col_off=input_dim)

    # decoders; first decoder rows at [I, I+L), duplicated at [I+L, I+2L)
    for l in range(n_hidden):
        w, b = layers[n_hidden + 2 + l]
        idx = n_hidden + 1 + l
        if l == 0:
            w_slab, b_slab = put(w_slab, b_slab, idx, w, b, row_off=input_dim)
            w_slab = w_slab.at[
                idx,
                input_dim + latent_dim:input_dim + 2 * latent_dim,
                :w.shape[1],
            ].set(w)
        else:
            w_slab, b_slab = put(w_slab, b_slab, idx, w, b)

    # fc_out (offset 0)
    w_out, b_out = layers[2 * n_hidden + 2]
    w_slab, b_slab = put(w_slab, b_slab, n_layers - 1, w_out, b_out)

    # extra bias-slab row: logvar-lane mask (1.0 exactly on [I+L, I+2L))
    b_slab = b_slab.at[
        n_layers, 0, input_dim + latent_dim:input_dim + 2 * latent_dim
    ].set(1.0)

    return w_slab, b_slab


# ----------------------------------------------------------------------------
# Wrapper
# ----------------------------------------------------------------------------
@functools.partial(jax.jit, static_argnames=("n_hidden",))
def vae_forward(x, eps, w_slab, b_slab, n_hidden):
    B, input_dim = x.shape
    latent_dim = eps.shape[1]
    n_layers, pad, _ = w_slab.shape
    assert input_dim + 2 * latent_dim <= pad
    assert b_slab.shape[0] == n_layers + 1

    # Batch tile: multiple of 8 (f32 sublane), capped at 2048 rows (safe under
    # v5e's 16 MiB scoped-VMEM default), and chosen so the grid has >= 2 steps
    # when there is enough work (lets v7x megacore use both TensorCores).
    b_r8 = _round_up(max(B, 1), 8)
    if b_r8 > 8:
        tile_b = min(2048, _round_up(_cdiv(b_r8, 2), 8))
    else:
        tile_b = 8
    b_pad = _round_up(b_r8, tile_b)

    # Only batch-dim row padding in the wrapper; NO lane-inflated arrays in HBM.
    x32 = x.astype(jnp.float32)
    eps32 = eps.astype(jnp.float32)
    if b_pad != B:
        x_in = jnp.zeros((b_pad, input_dim), jnp.float32).at[:B].set(x32)
        eps_in = jnp.zeros((b_pad, latent_dim), jnp.float32).at[:B].set(eps32)
    else:
        x_in, eps_in = x32, eps32

    kernel = _make_vae_kernel(n_hidden, input_dim, latent_dim)

    out_p = pl.pallas_call(
        kernel,
        out_shape=jax.ShapeDtypeStruct((b_pad, pad), jnp.float32),
        grid=(b_pad // tile_b,),
        in_specs=[
            # narrow inputs; last dim == full array dim (allowed), padded in VMEM
            pl.BlockSpec((tile_b, input_dim), lambda i: (i, 0)),        # x
            pl.BlockSpec((tile_b, latent_dim), lambda i: (i, 0)),       # eps
            pl.BlockSpec((n_layers, pad, pad), lambda i: (0, 0, 0)),    # weights (resident)
            pl.BlockSpec((n_layers + 1, 1, pad), lambda i: (0, 0, 0)),  # biases + lv mask
        ],
        # single merged lane-dense output: recon | mu | logvar
        out_specs=pl.BlockSpec((tile_b, pad), lambda i: (i, 0)),
        scratch_shapes=[
            pltpu.VMEM((tile_b, pad), jnp.float32),   # lane-padded x
            pltpu.VMEM((tile_b, pad), jnp.float32),   # lane-padded eps
        ],
        compiler_params=pltpu.CompilerParams(
            dimension_semantics=("parallel",),        # megacore sharding on v7x
        ),
    )(x_in, eps_in, w_slab, b_slab)

    recon = out_p[:B, :input_dim]
    mu = out_p[:B, input_dim:input_dim + latent_dim]
    logvar = out_p[:B, input_dim + latent_dim:input_dim + 2 * latent_dim]
    return recon, mu, logvar


# ----------------------------------------------------------------------------
# Pure-JAX reference (unpacked params) for correctness checking
# ----------------------------------------------------------------------------
def vae_forward_ref(x, eps, layers, n_hidden):
    h = x
    for i in range(n_hidden):
        w, b = layers[i]
        h = jnp.maximum(h @ w + b, 0.0)
    w_mu, b_mu = layers[n_hidden]
    w_lv, b_lv = layers[n_hidden + 1]
    mu = h @ w_mu + b_mu
    logvar = h @ w_lv + b_lv
    z = mu + eps * jnp.exp(0.5 * logvar)
    for i in range(n_hidden):
        w, b = layers[n_hidden + 2 + i]
        z = jnp.maximum(z @ w + b, 0.0)
    w_out, b_out = layers[2 * n_hidden + 2]
    return z @ w_out + b_out, mu, logvar


if __name__ == "__main__":
    # Small, airfoil-VAE-like configuration.
    batch = 2
    input_dim = 16
    hidden_sizes = (32, 16)
    latent_dim = 8
    n_hidden = len(hidden_sizes)

    root = jax.random.PRNGKey(0)
    k_x, k_eps, k_params = jax.random.split(root, 3)

    x = jax.random.normal(k_x, (batch, input_dim), jnp.float32)
    # torch.randn_like-equivalent reparameterization noise, passed explicitly.
    eps = jax.random.normal(k_eps, (batch, latent_dim), jnp.float32)

    layers = init_vae_params(k_params, input_dim, hidden_sizes, latent_dim)
    w_slab, b_slab = pack_vae_params(layers, input_dim, hidden_sizes, latent_dim)

    recon, mu, logvar = vae_forward(x, eps, w_slab, b_slab, n_hidden)
    jax.block_until_ready((recon, mu, logvar))

    recon_r, mu_r, logvar_r = vae_forward_ref(x, eps, layers, n_hidden)
    assert recon.shape == (batch, input_dim)
    assert mu.shape == (batch, latent_dim) and logvar.shape == (batch, latent_dim)
    assert jnp.allclose(recon, recon_r, atol=1e-4, rtol=1e-4)
    assert jnp.allclose(mu, mu_r, atol=1e-4, rtol=1e-4)
    assert jnp.allclose(logvar, logvar_r, atol=1e-4, rtol=1e-4)

    print("KERNEL_OK")
</pallas_src>

<mosaic_0001>
module attributes {stable_mosaic.version = 11 : i64} {
  func.func @kernel(%arg0: i32, %arg1: memref<8x16xf32, #tpu.memory_space<vmem>>, %arg2: memref<8x8xf32, #tpu.memory_space<vmem>>, %arg3: memref<6x128x128xf32, #tpu.memory_space<vmem>>, %arg4: memref<7x1x128xf32, #tpu.memory_space<vmem>>, %arg5: memref<8x128xf32, #tpu.memory_space<vmem>>, %arg6: memref<8x128xf32, #tpu.memory_space<vmem>>, %arg7: memref<8x128xf32, #tpu.memory_space<vmem>>) attributes {dimension_semantics = [#tpu.dimension_semantics<parallel>], iteration_bounds = array<i64: 1>, scalar_prefetch = 0 : i64, scratch_operands = 2 : i64, tpu.core_type = #tpu.core_type<tc>, window_params = [{transform_indices = @transform_0, window_bounds = array<i64: 8, 16>}, {transform_indices = @transform_1, window_bounds = array<i64: 8, 8>}, {pipeline_mode = #tpu.pipeline_mode<synchronous>, transform_indices = @transform_2, window_bounds = array<i64: 6, 128, 128>}, {pipeline_mode = #tpu.pipeline_mode<synchronous>, transform_indices = @transform_3, window_bounds = array<i64: 7, 1, 128>}, {transform_indices = @transform_4, window_bounds = array<i64: 8, 128>}]} {
    %cst = arith.constant 0.000000e+00 : f32
    %0 = vector.broadcast %cst : f32 to vector<8x128xf32>
    %c0 = arith.constant 0 : index
    %c0_0 = arith.constant 0 : index
    %1 = vector.load %arg6[%c0, %c0_0] : memref<8x128xf32, #tpu.memory_space<vmem>>, vector<8x128xf32>
    tpu.vector_store %arg6[%c0, %c0_0], %0 {strides = array<i32>} : memref<8x128xf32, #tpu.memory_space<vmem>>, vector<8x128xf32>,
    %c0_1 = arith.constant 0 : index
    %c0_2 = arith.constant 0 : index
    %2 = vector.load %arg1[%c0_1, %c0_2] : memref<8x16xf32, #tpu.memory_space<vmem>>, vector<8x16xf32>
    %c0_3 = arith.constant 0 : index
    %c0_4 = arith.constant 0 : index
    %3 = vector.load %arg6[%c0_3, %c0_4] : memref<8x128xf32, #tpu.memory_space<vmem>>, vector<8x16xf32>
    tpu.vector_store %arg6[%c0_3, %c0_4], %2 {strides = array<i32>} : memref<8x128xf32, #tpu.memory_space<vmem>>, vector<8x16xf32>,
    %c0_5 = arith.constant 0 : index
    %c0_6 = arith.constant 0 : index
    %4 = vector.load %arg6[%c0_5, %c0_6] : memref<8x128xf32, #tpu.memory_space<vmem>>, vector<8x128xf32>
    %c0_7 = arith.constant 0 : index
    %c0_8 = arith.constant 0 : index
    %c0_9 = arith.constant 0 : index
    %5 = vector.load %arg3[%c0_7, %c0_8, %c0_9] : memref<6x128x128xf32, #tpu.memory_space<vmem>>, vector<1x128x128xf32>
    %6 = vector.shape_cast %5 : vector<1x128x128xf32> to vector<128x128xf32>
    %cst_10 = arith.constant dense<0.000000e+00> : vector<8x128xf32>
    %7 = tpu.matmul %4, %6, %cst_10 {dimension_numbers = #tpu.dot_dimension_numbers<[1], [0], [0], [1], [0, 0, 1, 1], [], []>} : vector<8x128xf32>, vector<128x128xf32>, vector<8x128xf32> -> vector<8x128xf32>
    %c0_11 = arith.constant 0 : index
    %c0_12 = arith.constant 0 : index
    %c0_13 = arith.constant 0 : index
    %8 = vector.load %arg4[%c0_11, %c0_12, %c0_13] : memref<7x1x128xf32, #tpu.memory_space<vmem>>, vector<1x1x128xf32>
    %9 = vector.shape_cast %8 : vector<1x1x128xf32> to vector<1x128xf32>
    %10 = vector.broadcast %9 : vector<1x128xf32> to vector<8x128xf32>
    %11 = arith.addf %7, %10 : vector<8x128xf32>
    %cst_14 = arith.constant 0.000000e+00 : f32
    %12 = vector.broadcast %cst_14 : f32 to vector<8x128xf32>
    %13 = arith.maximumf %11, %12 : vector<8x128xf32>
    %c1 = arith.constant 1 : index
    %c0_15 = arith.constant 0 : index
    %c0_16 = arith.constant 0 : index
    %14 = vector.load %arg3[%c1, %c0_15, %c0_16] : memref<6x128x128xf32, #tpu.memory_space<vmem>>, vector<1x128x128xf32>
    %15 = vector.shape_cast %14 : vector<1x128x128xf32> to vector<128x128xf32>
    %cst_17 = arith.constant dense<0.000000e+00> : vector<8x128xf32>
    %16 = tpu.matmul %13, %15, %cst_17 {dimension_numbers = #tpu.dot_dimension_numbers<[1], [0], [0], [1], [0, 0, 1, 1], [], []>} : vector<8x128xf32>, vector<128x128xf32>, vector<8x128xf32> -> vector<8x128xf32>
    %c1_18 = arith.constant 1 : index
    %c0_19 = arith.constant 0 : index
    %c0_20 = arith.constant 0 : index
    %17 = vector.load %arg4[%c1_18, %c0_19, %c0_20] : memref<7x1x128xf32, #tpu.memory_space<vmem>>, vector<1x1x128xf32>
    %18 = vector.shape_cast %17 : vector<1x1x128xf32> to vector<1x128xf32>
    %19 = vector.broadcast %18 : vector<1x128xf32> to vector<8x128xf32>
    %20 = arith.addf %16, %19 : vector<8x128xf32>
    %cst_21 = arith.constant 0.000000e+00 : f32
    %21 = vector.broadcast %cst_21 : f32 to vector<8x128xf32>
    %22 = arith.maximumf %20, %21 : vector<8x128xf32>
    %c2 = arith.constant 2 : index
    %c0_22 = arith.constant 0 : index
    %c0_23 = arith.constant 0 : index
    %23 = vector.load %arg3[%c2, %c0_22, %c0_23] : memref<6x128x128xf32, #tpu.memory_space<vmem>>, vector<1x128x128xf32>
    %24 = vector.shape_cast %23 : vector<1x128x128xf32> to vector<128x128xf32>
    %cst_24 = arith.constant dense<0.000000e+00> : vector<8x128xf32>
    %25 = tpu.matmul %22, %24, %cst_24 {dimension_numbers = #tpu.dot_dimension_numbers<[1], [0], [0], [1], [0, 0, 1, 1], [], []>} : vector<8x128xf32>, vector<128x128xf32>, vector<8x128xf32> -> vector<8x128xf32>
    %c2_25 = arith.constant 2 : index
    %c0_26 = arith.constant 0 : index
    %c0_27 = arith.constant 0 : index
    %26 = vector.load %arg4[%c2_25, %c0_26, %c0_27] : memref<7x1x128xf32, #tpu.memory_space<vmem>>, vector<1x1x128xf32>
    %27 = vector.shape_cast %26 : vector<1x1x128xf32> to vector<1x128xf32>
    %28 = vector.broadcast %27 : vector<1x128xf32> to vector<8x128xf32>
    %29 = arith.addf %25, %28 : vector<8x128xf32>
    %cst_28 = arith.constant 0.000000e+00 : f32
    %30 = vector.broadcast %cst_28 : f32 to vector<8x128xf32>
    %c0_29 = arith.constant 0 : index
    %c0_30 = arith.constant 0 : index
    %31 = vector.load %arg7[%c0_29, %c0_30] : memref<8x128xf32, #tpu.memory_space<vmem>>, vector<8x128xf32>
    tpu.vector_store %arg7[%c0_29, %c0_30], %30 {strides = array<i32>} : memref<8x128xf32, #tpu.memory_space<vmem>>, vector<8x128xf32>,
    %c0_31 = arith.constant 0 : index
    %c0_32 = arith.constant 0 : index
    %32 = vector.load %arg2[%c0_31, %c0_32] : memref<8x8xf32, #tpu.memory_space<vmem>>, vector<8x8xf32>
    %c0_33 = arith.constant 0 : index
    %c0_34 = arith.constant 0 : index
    %33 = vector.load %arg7[%c0_33, %c0_34] : memref<8x128xf32, #tpu.memory_space<vmem>>, vector<8x8xf32>
    tpu.vector_store %arg7[%c0_33, %c0_34], %32 {strides = array<i32>} : memref<8x128xf32, #tpu.memory_space<vmem>>, vector<8x8xf32>,
    %c0_35 = arith.constant 0 : index
    %c0_36 = arith.constant 0 : index
    %34 = vector.load %arg7[%c0_35, %c0_36] : memref<8x128xf32, #tpu.memory_space<vmem>>, vector<8x128xf32>
    %c24_i32 = arith.constant 24 : i32
    %35 = tpu.dynamic_rotate %34 by %c24_i32 dim 1 : vector<8x128xf32>, i32 -> vector<8x128xf32>
    %c6 = arith.constant 6 : index
    %c0_37 = arith.constant 0 : index
    %c0_38 = arith.constant 0 : index
    %36 = vector.load %arg4[%c6, %c0_37, %c0_38] : memref<7x1x128xf32, #tpu.memory_space<vmem>>, vector<1x1x128xf32>
    %37 = vector.shape_cast %36 : vector<1x1x128xf32> to vector<1x128xf32>
    %38 = vector.broadcast %37 : vector<1x128xf32> to vector<8x128xf32>
    %39 = arith.mulf %29, %38 : vector<8x128xf32>
    %cst_39 = arith.constant 5.000000e-01 : f32
    %40 = vector.broadcast %cst_39 : f32 to vector<8x128xf32>
    %41 = arith.mulf %40, %39 : vector<8x128xf32>
    %42 = math.exp %41 : vector<8x128xf32>
    %43 = arith.subf %29, %39 : vector<8x128xf32>
    %44 = arith.mulf %35, %42 : vector<8x128xf32>
    %45 = arith.addf %43, %44 : vector<8x128xf32>
    %c3 = arith.constant 3 : index
    %c0_40 = arith.constant 0 : index
    %c0_41 = arith.constant 0 : index
    %46 = vector.load %arg3[%c3, %c0_40, %c0_41] : memref<6x128x128xf32, #tpu.memory_space<vmem>>, vector<1x128x128xf32>
    %47 = vector.shape_cast %46 : vector<1x128x128xf32> to vector<128x128xf32>
    %cst_42 = arith.constant dense<0.000000e+00> : vector<8x128xf32>
    %48 = tpu.matmul %45, %47, %cst_42 {dimension_numbers = #tpu.dot_dimension_numbers<[1], [0], [0], [1], [0, 0, 1, 1], [], []>} : vector<8x128xf32>, vector<128x128xf32>, vector<8x128xf32> -> vector<8x128xf32>
    %c3_43 = arith.constant 3 : index
    %c0_44 = arith.constant 0 : index
    %c0_45 = arith.constant 0 : index
    %49 = vector.load %arg4[%c3_43, %c0_44, %c0_45] : memref<7x1x128xf32, #tpu.memory_space<vmem>>, vector<1x1x128xf32>
    %50 = vector.shape_cast %49 : vector<1x1x128xf32> to vector<1x128xf32>
    %51 = vector.broadcast %50 : vector<1x128xf32> to vector<8x128xf32>
    %52 = arith.addf %48, %51 : vector<8x128xf32>
    %cst_46 = arith.constant 0.000000e+00 : f32
    %53 = vector.broadcast %cst_46 : f32 to vector<8x128xf32>
    %54 = arith.maximumf %52, %53 : vector<8x128xf32>
    %c4 = arith.constant 4 : index
    %c0_47 = arith.constant 0 : index
    %c0_48 = arith.constant 0 : index
    %55 = vector.load %arg3[%c4, %c0_47, %c0_48] : memref<6x128x128xf32, #tpu.memory_space<vmem>>, vector<1x128x128xf32>
    %56 = vector.shape_cast %55 : vector<1x128x128xf32> to vector<128x128xf32>
    %cst_49 = arith.constant dense<0.000000e+00> : vector<8x128xf32>
    %57 = tpu.matmul %54, %56, %cst_49 {dimension_numbers = #tpu.dot_dimension_numbers<[1], [0], [0], [1], [0, 0, 1, 1], [], []>} : vector<8x128xf32>, vector<128x128xf32>, vector<8x128xf32> -> vector<8x128xf32>
    %c4_50 = arith.constant 4 : index
    %c0_51 = arith.constant 0 : index
    %c0_52 = arith.constant 0 : index
    %58 = vector.load %arg4[%c4_50, %c0_51, %c0_52] : memref<7x1x128xf32, #tpu.memory_space<vmem>>, vector<1x1x128xf32>
    %59 = vector.shape_cast %58 : vector<1x1x128xf32> to vector<1x128xf32>
    %60 = vector.broadcast %59 : vector<1x128xf32> to vector<8x128xf32>
    %61 = arith.addf %57, %60 : vector<8x128xf32>
    %cst_53 = arith.constant 0.000000e+00 : f32
    %62 = vector.broadcast %cst_53 : f32 to vector<8x128xf32>
    %63 = arith.maximumf %61, %62 : vector<8x128xf32>
    %c5 = arith.constant 5 : index
    %c0_54 = arith.constant 0 : index
    %c0_55 = arith.constant 0 : index
    %64 = vector.load %arg3[%c5, %c0_54, %c0_55] : memref<6x128x128xf32, #tpu.memory_space<vmem>>, vector<1x128x128xf32>
    %65 = vector.shape_cast %64 : vector<1x128x128xf32> to vector<128x128xf32>
    %cst_56 = arith.constant dense<0.000000e+00> : vector<8x128xf32>
    %66 = tpu.matmul %63, %65, %cst_56 {dimension_numbers = #tpu.dot_dimension_numbers<[1], [0], [0], [1], [0, 0, 1, 1], [], []>} : vector<8x128xf32>, vector<128x128xf32>, vector<8x128xf32> -> vector<8x128xf32>
    %c5_57 = arith.constant 5 : index
    %c0_58 = arith.constant 0 : index
    %c0_59 = arith.constant 0 : index
    %67 = vector.load %arg4[%c5_57, %c0_58, %c0_59] : memref<7x1x128xf32, #tpu.memory_space<vmem>>, vector<1x1x128xf32>
    %68 = vector.shape_cast %67 : vector<1x1x128xf32> to vector<1x128xf32>
    %69 = vector.broadcast %68 : vector<1x128xf32> to vector<8x128xf32>
    %70 = arith.addf %66, %69 : vector<8x128xf32>
    %71 = arith.addf %70, %29 : vector<8x128xf32>
    %c0_60 = arith.constant 0 : index
    %c0_61 = arith.constant 0 : index
    %72 = vector.load %arg5[%c0_60, %c0_61] : memref<8x128xf32, #tpu.memory_space<vmem>>, vector<8x128xf32>
    tpu.vector_store %arg5[%c0_60, %c0_61], %71 {strides = array<i32>} : memref<8x128xf32, #tpu.memory_space<vmem>>, vector<8x128xf32>,
    return
  }
  func.func @transform_0(%arg0: i32) -> (i32, i32) {
    %c0_i32 = arith.constant 0 : i32
    %c0_i32_0 = arith.constant 0 : i32
    return %arg0, %c0_i32 : i32, i32
  }
  func.func @transform_1(%arg0: i32) -> (i32, i32) {
    %c0_i32 = arith.constant 0 : i32
    %c0_i32_0 = arith.constant 0 : i32
    return %arg0, %c0_i32 : i32, i32
  }
  func.func @transform_2(%arg0: i32) -> (i32, i32, i32) {
    %c0_i32 = arith.constant 0 : i32
    %c0_i32_0 = arith.constant 0 : i32
    %c0_i32_1 = arith.constant 0 : i32
    %c0_i32_2 = arith.constant 0 : i32
    return %c0_i32, %c0_i32_0, %c0_i32_1 : i32, i32, i32
  }
  func.func @transform_3(%arg0: i32) -> (i32, i32, i32) {
    %c0_i32 = arith.constant 0 : i32
    %c0_i32_0 = arith.constant 0 : i32
    %c0_i32_1 = arith.constant 0 : i32
    %c0_i32_2 = arith.constant 0 : i32
    return %c0_i32, %c0_i32_0, %c0_i32_1 : i32, i32, i32
  }
  func.func @transform_4(%arg0: i32) -> (i32, i32) {
    %c0_i32 = arith.constant 0 : i32
    %c0_i32_0 = arith.constant 0 : i32
    return %arg0, %c0_i32 : i32, i32
  }
}

</mosaic_0001>

<llo_original>
// kernel: vae_forward.1
$region0: #{vae_forward.1}
  #allocation0 [shape = 'u32[]', space=smem, size = 0x4, offset = 0x4, fixed_abs, tag = 'smem constant byte address 0x4 - core index']
  #allocation1 [shape = 'u32[144,128]{1,0:T(1,128)}', space=vmem, size = 0x12000, scoped, tag = 'internal scratch']
  #allocation2 [shape = 'f32[8,128]{1,0:T(8,128)}', space=vmem, size = 0x1000, scoped, tag = 'scratch operand']
  #allocation3 [shape = 'f32[8,128]{1,0:T(8,128)}', space=vmem, size = 0x1000, scoped, tag = 'scratch operand']
  %s0 = inlined_call_operand.vmem [shape: f32[8,16], index: 0, kind: input, shape index: {}]
  %s1 = inlined_call_operand.vmem [shape: f32[8,8], index: 1, kind: input, shape index: {}]
  %s2 = inlined_call_operand.hbm [shape: f32[6,128,128], index: 2, kind: input, shape index: {}]
  %s3 = inlined_call_operand.vmem [shape: f32[7,1,128], index: 3, kind: input, shape index: {}]
  %s4 = inlined_call_operand.vmem [shape: f32[8,128], index: 4, kind: output, shape index: {}]
  %s5 = sld [smem:[#allocation0]]
  $region30: #{vae_forward.1} parent=0
    _
  %s7 = ssub.s32 1, %s5
  %s8 = scalar_select 0, %s7, %s5
  $region1: #{vae_forward.1} parent=0
    #allocation4 [shape = 'u8[393216]{0}', space=vmem, size = 0x60000, scoped, tag = 'input window, operand 2, single buffered']
    #allocation5 [shape = 's32[1]{0}', space=sflag, size = 0x4, scoped, tag = 'scoped memory for vae_forward.1']
    %9 = vsyncpa [#allocation5], 0
    // Predicated region
    $region2: #{vae_forward.1} parent=1 // pred_check
      _
    $region3: #{vae_forward.1} parent=1 // pred_check_branch
      %11 = sbr.rel (0) target = $region5
    $region4: #{vae_forward.1} parent=1 // pred_region
      _
    $region5: #{vae_forward.1} parent=1 // pred_fallthru
      _
    // Predicated region
    $region6: #{vae_forward.1} parent=1 // pred_check
      _
    $region7: #{vae_forward.1} parent=1 // pred_check_branch
      %13 = sbr.rel (0) target = $region9
    $region8: #{vae_forward.1} parent=1 // pred_region
      _
    $region9: #{vae_forward.1} parent=1 // pred_fallthru
      _
    // Predicated region
    $region10: #{vae_forward.1} parent=1 // pred_check
      _
    $region11: #{vae_forward.1} parent=1 // pred_check_branch
      %15 = sbr.rel (0) target = $region13
    $region12: #{vae_forward.1} parent=1 // pred_region
      %s17 = ssub.s32 12288, 12288
      %18 = vsyncadd [#allocation5], %s17
      %s19 = sshll.u32 [#allocation4], 4
      %s20 = int_to_ptr.vmem [resolvable:$true] %s19
      %25 = dma.hbm_to_vmem [thread:$0]  %s2, 12288, %s20, [#allocation5], 128, 128, 8
    $region13: #{vae_forward.1} parent=1 // pred_fallthru
      _
    // Predicated region
    $region14: #{vae_forward.1} parent=1 // pred_check
      _
    $region15: #{vae_forward.1} parent=1 // pred_check_branch
      %27 = sbr.rel (0) target = $region17
    $region16: #{vae_forward.1} parent=1 // pred_region
      _
    $region17: #{vae_forward.1} parent=1 // pred_fallthru
      _
    // Predicated region
    $region18: #{vae_forward.1} parent=1 // pred_check
      _
    $region19: #{vae_forward.1} parent=1 // pred_check_branch
      %29 = sbr.rel (0) target = $region21
    $region20: #{vae_forward.1} parent=1 // pred_region
      %30 = dma.done [#allocation5], 12288
    $region21: #{vae_forward.1} parent=1 // pred_fallthru
      _
    %31 = vst [vmem:[#allocation2] sm:$0xff] 0.0
    %v32 = vld [vmem:[%s0] sm:$0xff]
    %vm33 = vcmask 130048
    %34 = vst.msk [vmem:[#allocation2] sm:$0xff] %vm33, %v32
    %v35 = vld [vmem:[#allocation2] sm:$0xff]
    %v36 = vld [vmem:[#allocation4] sm:$0xff]
    %v37 = vld [vmem:[#allocation4 + $0x8] sm:$0xff]
    %v38 = vld [vmem:[#allocation4 + $0x10] sm:$0xff]
    %v39 = vld [vmem:[#allocation4 + $0x18] sm:$0xff]
    %v40 = vld [vmem:[#allocation4 + $0x20] sm:$0xff]
    %v41 = vld [vmem:[#allocation4 + $0x28] sm:$0xff]
    %v42 = vld [vmem:[#allocation4 + $0x30] sm:$0xff]
    %v43 = vld [vmem:[#allocation4 + $0x38] sm:$0xff]
    %v44 = vld [vmem:[#allocation4 + $0x40] sm:$0xff]
    %v45 = vld [vmem:[#allocation4 + $0x48] sm:$0xff]
    %v46 = vld [vmem:[#allocation4 + $0x50] sm:$0xff]
    %v47 = vld [vmem:[#allocation4 + $0x58] sm:$0xff]
    %v48 = vld [vmem:[#allocation4 + $0x60] sm:$0xff]
    %v49 = vld [vmem:[#allocation4 + $0x68] sm:$0xff]
    %v50 = vld [vmem:[#allocation4 + $0x70] sm:$0xff]
    %v51 = vld [vmem:[#allocation4 + $0x78] sm:$0xff]
    %v52 = vld [vmem:[%s3] sm:$0x1]
    %v54 = vlaneseq
    %v55 = vshrl.u32 %v54, 7
    %v56 = vsub.s32 0, %v55
    %v57 = vrot.slane %v52, %v56
    %59 = vmatprep.subr.mxu0 0.0
    %60 = vmatpush1.msra.mxu0 %v36
    %61 = vmatprep.subr.mxu0 0.0
    %62 = vmatpush1.msra.mxu0 %v37
    %63 = vmatprep.subr.mxu0 0.0
    %64 = vmatpush1.msra.mxu0 %v38
    %65 = vmatprep.subr.mxu0 0.0
    %66 = vmatpush1.msra.mxu0 %v39
    %67 = vmatprep.subr.mxu0 0.0
    %68 = vmatpush1.msra.mxu0 %v40
    %69 = vmatprep.subr.mxu0 0.0
    %70 = vmatpush1.msra.mxu0 %v41
    %71 = vmatprep.subr.mxu0 0.0
    %72 = vmatpush1.msra.mxu0 %v42
    %73 = vmatprep.subr.mxu0 0.0
    %74 = vmatpush1.msra.mxu0 %v43
    %75 = vmatprep.subr.mxu0 0.0
    %76 = vmatpush1.msra.mxu0 %v44
    %77 = vmatprep.subr.mxu0 0.0
    %78 = vmatpush1.msra.mxu0 %v45
    %79 = vmatprep.subr.mxu0 0.0
    %80 = vmatpush1.msra.mxu0 %v46
    %81 = vmatprep.subr.mxu0 0.0
    %82 = vmatpush1.msra.mxu0 %v47
    %83 = vmatprep.subr.mxu0 0.0
    %84 = vmatpush1.msra.mxu0 %v48
    %85 = vmatprep.subr.mxu0 0.0
    %86 = vmatpush1.msra.mxu0 %v49
    %87 = vmatprep.subr.mxu0 0.0
    %88 = vmatpush1.msra.mxu0 %v50
    %89 = vmatprep.subr.mxu0 0.0
    %90 = vmatpush1.msra.mxu0 %v51
    %91 = vmatprep.subr.mxu0 0.0
    %92 = vmatpush1.msra.mxu0 0.0
    %93 = vmatprep.subr.mxu0 0.0
    %94 = vmatpush1.msra.mxu0 0.0
    %95 = vmatprep.subr.mxu0 0.0
    %96 = vmatpush1.msra.mxu0 0.0
    %97 = vmatprep.subr.mxu0 0.0
    %98 = vmatpush1.msra.mxu0 0.0
    %99 = vmatprep.subr.mxu0 0.0
    %100 = vmatpush1.msra.mxu0 0.0
    %101 = vmatprep.subr.mxu0 0.0
    %102 = vmatpush1.msra.mxu0 0.0
    %103 = vmatprep.subr.mxu0 0.0
    %104 = vmatpush1.msra.mxu0 0.0
    %105 = vmatprep.subr.mxu0 0.0
    %106 = vmatpush1.msra.mxu0 0.0
    %107 = vmatprep.subr.mxu0 0.0
    %108 = vmatpush1.msra.mxu0 0.0
    %109 = vmatprep.subr.mxu0 0.0
    %110 = vmatpush1.msra.mxu0 0.0
    %111 = vmatprep.subr.mxu0 0.0
    %112 = vmatpush1.msra.mxu0 0.0
    %113 = vmatprep.subr.mxu0 0.0
    %114 = vmatpush1.msra.mxu0 0.0
    %115 = vmatprep.subr.mxu0 0.0
    %116 = vmatpush1.msra.mxu0 0.0
    %117 = vmatprep.subr.mxu0 0.0
    %118 = vmatpush1.msra.mxu0 0.0
    %119 = vmatprep.subr.mxu0 0.0
    %120 = vmatpush1.msra.mxu0 0.0
    %121 = vmatprep.subr.mxu0 0.0
    %122 = vmatpush1.msra.mxu0 0.0
    %123 = vmatprep.mubr.f32.mxu0 0.0
    %124 = vmatmul.mubr.f32.gmra.mrb[0].mxu0 %v35
    %v125 = vpop.f32.mrb[0].mxu0
    %v126 = vadd.f32 %v57, %v125
    %v127 = vpop.f32.mrb[0].mxu0
    %128 = vdwg.mxu0
    %v129 = vmax.f32 %v126, 0.0
    %s130 = scalar_lea.vmem [#allocation4], 128
    %v131 = vld [vmem:[%s130] sm:$0xff]
    %v132 = vld [vmem:[%s130 + $0x8] sm:$0xff]
    %v133 = vld [vmem:[%s130 + $0x10] sm:$0xff]
    %v134 = vld [vmem:[%s130 + $0x18] sm:$0xff]
    %v135 = vld [vmem:[%s130 + $0x20] sm:$0xff]
    %v136 = vld [vmem:[%s130 + $0x28] sm:$0xff]
    %v137 = vld [vmem:[%s130 + $0x30] sm:$0xff]
    %v138 = vld [vmem:[%s130 + $0x38] sm:$0xff]
    %v139 = vld [vmem:[%s130 + $0x40] sm:$0xff]
    %v140 = vld [vmem:[%s130 + $0x48] sm:$0xff]
    %v141 = vld [vmem:[%s130 + $0x50] sm:$0xff]
    %v142 = vld [vmem:[%s130 + $0x58] sm:$0xff]
    %v143 = vld [vmem:[%s130 + $0x60] sm:$0xff]
    %v144 = vld [vmem:[%s130 + $0x68] sm:$0xff]
    %v145 = vld [vmem:[%s130 + $0x70] sm:$0xff]
    %v146 = vld [vmem:[%s130 + $0x78] sm:$0xff]
    %s147 = scalar_lea.vmem %s3, 1
    %v148 = vld [vmem:[%s147] sm:$0x1]
    %v150 = vlaneseq
    %v151 = vshrl.u32 %v150, 7
    %v152 = vsub.s32 0, %v151
    %v153 = vrot.slane %v148, %v152
    %155 = vmatprep.subr.mxu0 0.0
    %156 = vmatpush1.msra.mxu0 %v131
    %157 = vmatprep.subr.mxu0 0.0
    %158 = vmatpush1.msra.mxu0 %v132
    %159 = vmatprep.subr.mxu0 0.0
    %160 = vmatpush1.msra.mxu0 %v133
    %161 = vmatprep.subr.mxu0 0.0
    %162 = vmatpush1.msra.mxu0 %v134
    %163 = vmatprep.subr.mxu0 0.0
    %164 = vmatpush1.msra.mxu0 %v135
    %165 = vmatprep.subr.mxu0 0.0
    %166 = vmatpush1.msra.mxu0 %v136
    %167 = vmatprep.subr.mxu0 0.0
    %168 = vmatpush1.msra.mxu0 %v137
    %169 = vmatprep.subr.mxu0 0.0
    %170 = vmatpush1.msra.mxu0 %v138
    %171 = vmatprep.subr.mxu0 0.0
    %172 = vmatpush1.msra.mxu0 %v139
    %173 = vmatprep.subr.mxu0 0.0
    %174 = vmatpush1.msra.mxu0 %v140
    %175 = vmatprep.subr.mxu0 0.0
    %176 = vmatpush1.msra.mxu0 %v141
    %177 = vmatprep.subr.mxu0 0.0
    %178 = vmatpush1.msra.mxu0 %v142
    %179 = vmatprep.subr.mxu0 0.0
    %180 = vmatpush1.msra.mxu0 %v143
    %181 = vmatprep.subr.mxu0 0.0
    %182 = vmatpush1.msra.mxu0 %v144
    %183 = vmatprep.subr.mxu0 0.0
    %184 = vmatpush1.msra.mxu0 %v145
    %185 = vmatprep.subr.mxu0 0.0
    %186 = vmatpush1.msra.mxu0 %v146
    %187 = vmatprep.subr.mxu0 0.0
    %188 = vmatpush1.msra.mxu0 0.0
    %189 = vmatprep.subr.mxu0 0.0
    %190 = vmatpush1.msra.mxu0 0.0
    %191 = vmatprep.subr.mxu0 0.0
    %192 = vmatpush1.msra.mxu0 0.0
    %193 = vmatprep.subr.mxu0 0.0
    %194 = vmatpush1.msra.mxu0 0.0
    %195 = vmatprep.subr.mxu0 0.0
    %196 = vmatpush1.msra.mxu0 0.0
    %197 = vmatprep.subr.mxu0 0.0
    %198 = vmatpush1.msra.mxu0 0.0
    %199 = vmatprep.subr.mxu0 0.0
    %200 = vmatpush1.msra.mxu0 0.0
    %201 = vmatprep.subr.mxu0 0.0
    %202 = vmatpush1.msra.mxu0 0.0
    %203 = vmatprep.subr.mxu0 0.0
    %204 = vmatpush1.msra.mxu0 0.0
    %205 = vmatprep.subr.mxu0 0.0
    %206 = vmatpush1.msra.mxu0 0.0
    %207 = vmatprep.subr.mxu0 0.0
    %208 = vmatpush1.msra.mxu0 0.0
    %209 = vmatprep.subr.mxu0 0.0
    %210 = vmatpush1.msra.mxu0 0.0
    %211 = vmatprep.subr.mxu0 0.0
    %212 = vmatpush1.msra.mxu0 0.0
    %213 = vmatprep.subr.mxu0 0.0
    %214 = vmatpush1.msra.mxu0 0.0
    %215 = vmatprep.subr.mxu0 0.0
    %216 = vmatpush1.msra.mxu0 0.0
    %217 = vmatprep.subr.mxu0 0.0
    %218 = vmatpush1.msra.mxu0 0.0
    %219 = vmatprep.mubr.f32.mxu0 0.0
    %220 = vmatmul.mubr.f32.gmra.mrb[0].mxu0 %v129
    %v221 = vpop.f32.mrb[0].mxu0
    %v222 = vadd.f32 %v153, %v221
    %v223 = vpop.f32.mrb[0].mxu0
    %224 = vdwg.mxu0
    %v225 = vmax.f32 %v222, 0.0
    %s226 = scalar_lea.vmem [#allocation4], 256
    %v227 = vld [vmem:[%s226] sm:$0xff]
    %v228 = vld [vmem:[%s226 + $0x8] sm:$0xff]
    %v229 = vld [vmem:[%s226 + $0x10] sm:$0xff]
    %v230 = vld [vmem:[%s226 + $0x18] sm:$0xff]
    %v231 = vld [vmem:[%s226 + $0x20] sm:$0xff]
    %v232 = vld [vmem:[%s226 + $0x28] sm:$0xff]
    %v233 = vld [vmem:[%s226 + $0x30] sm:$0xff]
    %v234 = vld [vmem:[%s226 + $0x38] sm:$0xff]
    %v235 = vld [vmem:[%s226 + $0x40] sm:$0xff]
    %v236 = vld [vmem:[%s226 + $0x48] sm:$0xff]
    %v237 = vld [vmem:[%s226 + $0x50] sm:$0xff]
    %v238 = vld [vmem:[%s226 + $0x58] sm:$0xff]
    %v239 = vld [vmem:[%s226 + $0x60] sm:$0xff]
    %v240 = vld [vmem:[%s226 + $0x68] sm:$0xff]
    %v241 = vld [vmem:[%s226 + $0x70] sm:$0xff]
    %v242 = vld [vmem:[%s226 + $0x78] sm:$0xff]
    %s243 = scalar_lea.vmem %s3, 2
    %v244 = vld [vmem:[%s243] sm:$0x1]
    %v246 = vlaneseq
    %v247 = vshrl.u32 %v246, 7
    %v248 = vsub.s32 0, %v247
    %v249 = vrot.slane %v244, %v248
    %251 = vmatprep.subr.mxu0 0.0
    %252 = vmatpush1.msra.mxu0 %v227
    %253 = vmatprep.subr.mxu0 0.0
    %254 = vmatpush1.msra.mxu0 %v228
    %255 = vmatprep.subr.mxu0 0.0
    %256 = vmatpush1.msra.mxu0 %v229
    %257 = vmatprep.subr.mxu0 0.0
    %258 = vmatpush1.msra.mxu0 %v230
    %259 = vmatprep.subr.mxu0 0.0
    %260 = vmatpush1.msra.mxu0 %v231
    %261 = vmatprep.subr.mxu0 0.0
    %262 = vmatpush1.msra.mxu0 %v232
    %263 = vmatprep.subr.mxu0 0.0
    %264 = vmatpush1.msra.mxu0 %v233
    %265 = vmatprep.subr.mxu0 0.0
    %266 = vmatpush1.msra.mxu0 %v234
    %267 = vmatprep.subr.mxu0 0.0
    %268 = vmatpush1.msra.mxu0 %v235
    %269 = vmatprep.subr.mxu0 0.0
    %270 = vmatpush1.msra.mxu0 %v236
    %271 = vmatprep.subr.mxu0 0.0
    %272 = vmatpush1.msra.mxu0 %v237
    %273 = vmatprep.subr.mxu0 0.0
    %274 = vmatpush1.msra.mxu0 %v238
    %275 = vmatprep.subr.mxu0 0.0
    %276 = vmatpush1.msra.mxu0 %v239
    %277 = vmatprep.subr.mxu0 0.0
    %278 = vmatpush1.msra.mxu0 %v240
    %279 = vmatprep.subr.mxu0 0.0
    %280 = vmatpush1.msra.mxu0 %v241
    %281 = vmatprep.subr.mxu0 0.0
    %282 = vmatpush1.msra.mxu0 %v242
    %283 = vmatprep.subr.mxu0 0.0
    %284 = vmatpush1.msra.mxu0 0.0
    %285 = vmatprep.subr.mxu0 0.0
    %286 = vmatpush1.msra.mxu0 0.0
    %287 = vmatprep.subr.mxu0 0.0
    %288 = vmatpush1.msra.mxu0 0.0
    %289 = vmatprep.subr.mxu0 0.0
    %290 = vmatpush1.msra.mxu0 0.0
    %291 = vmatprep.subr.mxu0 0.0
    %292 = vmatpush1.msra.mxu0 0.0
    %293 = vmatprep.subr.mxu0 0.0
    %294 = vmatpush1.msra.mxu0 0.0
    %295 = vmatprep.subr.mxu0 0.0
    %296 = vmatpush1.msra.mxu0 0.0
    %297 = vmatprep.subr.mxu0 0.0
    %298 = vmatpush1.msra.mxu0 0.0
    %299 = vmatprep.subr.mxu0 0.0
    %300 = vmatpush1.msra.mxu0 0.0
    %301 = vmatprep.subr.mxu0 0.0
    %302 = vmatpush1.msra.mxu0 0.0
    %303 = vmatprep.subr.mxu0 0.0
    %304 = vmatpush1.msra.mxu0 0.0
    %305 = vmatprep.subr.mxu0 0.0
    %306 = vmatpush1.msra.mxu0 0.0
    %307 = vmatprep.subr.mxu0 0.0
    %308 = vmatpush1.msra.mxu0 0.0
    %309 = vmatprep.subr.mxu0 0.0
    %310 = vmatpush1.msra.mxu0 0.0
    %311 = vmatprep.subr.mxu0 0.0
    %312 = vmatpush1.msra.mxu0 0.0
    %313 = vmatprep.subr.mxu0 0.0
    %314 = vmatpush1.msra.mxu0 0.0
    %315 = vmatprep.mubr.f32.mxu0 0.0
    %316 = vmatmul.mubr.f32.gmra.mrb[0].mxu0 %v225
    %v317 = vpop.f32.mrb[0].mxu0
    %v318 = vadd.f32 %v249, %v317
    %v319 = vpop.f32.mrb[0].mxu0
    %320 = vdwg.mxu0
    %321 = vst [vmem:[#allocation3] sm:$0xff] 0.0
    %v322 = vld [vmem:[%s1] sm:$0xff]
    %vm323 = vcmask 64512
    %324 = vst.msk [vmem:[#allocation3] sm:$0xff] %vm323, %v322
    %v325 = vld [vmem:[#allocation3] sm:$0xff]
    %326 = vrot.lane.b32.xlu0 %v325, 24
    %v327 = vpop.permute.xlu0 %326
    %s328 = scalar_lea.vmem %s3, 6
    %v329 = vld [vmem:[%s328] sm:$0x1]
    %v331 = vlaneseq
    %v332 = vshrl.u32 %v331, 7
    %v333 = vsub.s32 0, %v332
    %v334 = vrot.slane %v329, %v333
    %v336 = vmul.f32 %v318, %v334
    %v337 = vmul.f32 %v336, 0.5
    %v338 = vmul.f32 %v337, 1.442695
    %v339 = vpow.pop %v338
    %v340 = vsub.f32 %v318, %v336
    %v341 = vmul.f32 %v327, %v339
    %v342 = vadd.f32 %v340, %v341
    %s343 = scalar_lea.vmem [#allocation4], 384
    %v344 = vld [vmem:[%s343] sm:$0xff]
    %v345 = vld [vmem:[%s343 + $0x8] sm:$0xff]
    %v346 = vld [vmem:[%s343 + $0x10] sm:$0xff]
    %v347 = vld [vmem:[%s343 + $0x18] sm:$0xff]
    %v348 = vld [vmem:[%s343 + $0x20] sm:$0xff]
    %v349 = vld [vmem:[%s343 + $0x28] sm:$0xff]
    %v350 = vld [vmem:[%s343 + $0x30] sm:$0xff]
    %v351 = vld [vmem:[%s343 + $0x38] sm:$0xff]
    %v352 = vld [vmem:[%s343 + $0x40] sm:$0xff]
    %v353 = vld [vmem:[%s343 + $0x48] sm:$0xff]
    %v354 = vld [vmem:[%s343 + $0x50] sm:$0xff]
    %v355 = vld [vmem:[%s343 + $0x58] sm:$0xff]
    %v356 = vld [vmem:[%s343 + $0x60] sm:$0xff]
    %v357 = vld [vmem:[%s343 + $0x68] sm:$0xff]
    %v358 = vld [vmem:[%s343 + $0x70] sm:$0xff]
    %v359 = vld [vmem:[%s343 + $0x78] sm:$0xff]
    %s360 = scalar_lea.vmem %s3, 3
    %v361 = vld [vmem:[%s360] sm:$0x1]
    %v363 = vlaneseq
    %v364 = vshrl.u32 %v363, 7
    %v365 = vsub.s32 0, %v364
    %v366 = vrot.slane %v361, %v365
    %368 = vmatprep.subr.mxu0 0.0
    %369 = vmatpush1.msra.mxu0 %v344
    %370 = vmatprep.subr.mxu0 0.0
    %371 = vmatpush1.msra.mxu0 %v345
    %372 = vmatprep.subr.mxu0 0.0
    %373 = vmatpush1.msra.mxu0 %v346
    %374 = vmatprep.subr.mxu0 0.0
    %375 = vmatpush1.msra.mxu0 %v347
    %376 = vmatprep.subr.mxu0 0.0
    %377 = vmatpush1.msra.mxu0 %v348
    %378 = vmatprep.subr.mxu0 0.0
    %379 = vmatpush1.msra.mxu0 %v349
    %380 = vmatprep.subr.mxu0 0.0
    %381 = vmatpush1.msra.mxu0 %v350
    %382 = vmatprep.subr.mxu0 0.0
    %383 = vmatpush1.msra.mxu0 %v351
    %384 = vmatprep.subr.mxu0 0.0
    %385 = vmatpush1.msra.mxu0 %v352
    %386 = vmatprep.subr.mxu0 0.0
    %387 = vmatpush1.msra.mxu0 %v353
    %388 = vmatprep.subr.mxu0 0.0
    %389 = vmatpush1.msra.mxu0 %v354
    %390 = vmatprep.subr.mxu0 0.0
    %391 = vmatpush1.msra.mxu0 %v355
    %392 = vmatprep.subr.mxu0 0.0
    %393 = vmatpush1.msra.mxu0 %v356
    %394 = vmatprep.subr.mxu0 0.0
    %395 = vmatpush1.msra.mxu0 %v357
    %396 = vmatprep.subr.mxu0 0.0
    %397 = vmatpush1.msra.mxu0 %v358
    %398 = vmatprep.subr.mxu0 0.0
    %399 = vmatpush1.msra.mxu0 %v359
    %400 = vmatprep.subr.mxu0 0.0
    %401 = vmatpush1.msra.mxu0 0.0
    %402 = vmatprep.subr.mxu0 0.0
    %403 = vmatpush1.msra.mxu0 0.0
    %404 = vmatprep.subr.mxu0 0.0
    %405 = vmatpush1.msra.mxu0 0.0
    %406 = vmatprep.subr.mxu0 0.0
    %407 = vmatpush1.msra.mxu0 0.0
    %408 = vmatprep.subr.mxu0 0.0
    %409 = vmatpush1.msra.mxu0 0.0
    %410 = vmatprep.subr.mxu0 0.0
    %411 = vmatpush1.msra.mxu0 0.0
    %412 = vmatprep.subr.mxu0 0.0
    %413 = vmatpush1.msra.mxu0 0.0
    %414 = vmatprep.subr.mxu0 0.0
    %415 = vmatpush1.msra.mxu0 0.0
    %416 = vmatprep.subr.mxu0 0.0
    %417 = vmatpush1.msra.mxu0 0.0
    %418 = vmatprep.subr.mxu0 0.0
    %419 = vmatpush1.msra.mxu0 0.0
    %420 = vmatprep.subr.mxu0 0.0
    %421 = vmatpush1.msra.mxu0 0.0
    %422 = vmatprep.subr.mxu0 0.0
    %423 = vmatpush1.msra.mxu0 0.0
    %424 = vmatprep.subr.mxu0 0.0
    %425 = vmatpush1.msra.mxu0 0.0
    %426 = vmatprep.subr.mxu0 0.0
    %427 = vmatpush1.msra.mxu0 0.0
    %428 = vmatprep.subr.mxu0 0.0
    %429 = vmatpush1.msra.mxu0 0.0
    %430 = vmatprep.subr.mxu0 0.0
    %431 = vmatpush1.msra.mxu0 0.0
    %432 = vmatprep.mubr.f32.mxu0 0.0
    %433 = vmatmul.mubr.f32.gmra.mrb[0].mxu0 %v342
    %v434 = vpop.f32.mrb[0].mxu0
    %v435 = vadd.f32 %v366, %v434
    %v436 = vpop.f32.mrb[0].mxu0
    %437 = vdwg.mxu0
    %v438 = vmax.f32 %v435, 0.0
    %s439 = scalar_lea.vmem [#allocation4], 512
    %v440 = vld [vmem:[%s439] sm:$0xff]
    %v441 = vld [vmem:[%s439 + $0x8] sm:$0xff]
    %v442 = vld [vmem:[%s439 + $0x10] sm:$0xff]
    %v443 = vld [vmem:[%s439 + $0x18] sm:$0xff]
    %v444 = vld [vmem:[%s439 + $0x20] sm:$0xff]
    %v445 = vld [vmem:[%s439 + $0x28] sm:$0xff]
    %v446 = vld [vmem:[%s439 + $0x30] sm:$0xff]
    %v447 = vld [vmem:[%s439 + $0x38] sm:$0xff]
    %v448 = vld [vmem:[%s439 + $0x40] sm:$0xff]
    %v449 = vld [vmem:[%s439 + $0x48] sm:$0xff]
    %v450 = vld [vmem:[%s439 + $0x50] sm:$0xff]
    %v451 = vld [vmem:[%s439 + $0x58] sm:$0xff]
    %v452 = vld [vmem:[%s439 + $0x60] sm:$0xff]
    %v453 = vld [vmem:[%s439 + $0x68] sm:$0xff]
    %v454 = vld [vmem:[%s439 + $0x70] sm:$0xff]
    %v455 = vld [vmem:[%s439 + $0x78] sm:$0xff]
    %s456 = scalar_lea.vmem %s3, 4
    %v457 = vld [vmem:[%s456] sm:$0x1]
    %v459 = vlaneseq
    %v460 = vshrl.u32 %v459, 7
    %v461 = vsub.s32 0, %v460
    %v462 = vrot.slane %v457, %v461
    %464 = vmatprep.subr.mxu0 0.0
    %465 = vmatpush1.msra.mxu0 %v440
    %466 = vmatprep.subr.mxu0 0.0
    %467 = vmatpush1.msra.mxu0 %v441
    %468 = vmatprep.subr.mxu0 0.0
    %469 = vmatpush1.msra.mxu0 %v442
    %470 = vmatprep.subr.mxu0 0.0
    %471 = vmatpush1.msra.mxu0 %v443
    %472 = vmatprep.subr.mxu0 0.0
    %473 = vmatpush1.msra.mxu0 %v444
    %474 = vmatprep.subr.mxu0 0.0
    %475 = vmatpush1.msra.mxu0 %v445
    %476 = vmatprep.subr.mxu0 0.0
    %477 = vmatpush1.msra.mxu0 %v446
    %478 = vmatprep.subr.mxu0 0.0
    %479 = vmatpush1.msra.mxu0 %v447
    %480 = vmatprep.subr.mxu0 0.0
    %481 = vmatpush1.msra.mxu0 %v448
    %482 = vmatprep.subr.mxu0 0.0
    %483 = vmatpush1.msra.mxu0 %v449
    %484 = vmatprep.subr.mxu0 0.0
    %485 = vmatpush1.msra.mxu0 %v450
    %486 = vmatprep.subr.mxu0 0.0
    %487 = vmatpush1.msra.mxu0 %v451
    %488 = vmatprep.subr.mxu0 0.0
    %489 = vmatpush1.msra.mxu0 %v452
    %490 = vmatprep.subr.mxu0 0.0
    %491 = vmatpush1.msra.mxu0 %v453
    %492 = vmatprep.subr.mxu0 0.0
    %493 = vmatpush1.msra.mxu0 %v454
    %494 = vmatprep.subr.mxu0 0.0
    %495 = vmatpush1.msra.mxu0 %v455
    %496 = vmatprep.subr.mxu0 0.0
    %497 = vmatpush1.msra.mxu0 0.0
    %498 = vmatprep.subr.mxu0 0.0
    %499 = vmatpush1.msra.mxu0 0.0
    %500 = vmatprep.subr.mxu0 0.0
    %501 = vmatpush1.msra.mxu0 0.0
    %502 = vmatprep.subr.mxu0 0.0
    %503 = vmatpush1.msra.mxu0 0.0
    %504 = vmatprep.subr.mxu0 0.0
    %505 = vmatpush1.msra.mxu0 0.0
    %506 = vmatprep.subr.mxu0 0.0
    %507 = vmatpush1.msra.mxu0 0.0
    %508 = vmatprep.subr.mxu0 0.0
    %509 = vmatpush1.msra.mxu0 0.0
    %510 = vmatprep.subr.mxu0 0.0
    %511 = vmatpush1.msra.mxu0 0.0
    %512 = vmatprep.subr.mxu0 0.0
    %513 = vmatpush1.msra.mxu0 0.0
    %514 = vmatprep.subr.mxu0 0.0
    %515 = vmatpush1.msra.mxu0 0.0
    %516 = vmatprep.subr.mxu0 0.0
    %517 = vmatpush1.msra.mxu0 0.0
    %518 = vmatprep.subr.mxu0 0.0
    %519 = vmatpush1.msra.mxu0 0.0
    %520 = vmatprep.subr.mxu0 0.0
    %521 = vmatpush1.msra.mxu0 0.0
    %522 = vmatprep.subr.mxu0 0.0
    %523 = vmatpush1.msra.mxu0 0.0
    %524 = vmatprep.subr.mxu0 0.0
    %525 = vmatpush1.msra.mxu0 0.0
    %526 = vmatprep.subr.mxu0 0.0
    %527 = vmatpush1.msra.mxu0 0.0
    %528 = vmatprep.mubr.f32.mxu0 0.0
    %529 = vmatmul.mubr.f32.gmra.mrb[0].mxu0 %v438
    %v530 = vpop.f32.mrb[0].mxu0
    %v531 = vadd.f32 %v462, %v530
    %v532 = vpop.f32.mrb[0].mxu0
    %533 = vdwg.mxu0
    %v534 = vmax.f32 %v531, 0.0
    %s535 = scalar_lea.vmem [#allocation4], 640
    %v536 = vld [vmem:[%s535] sm:$0xff]
    %v537 = vld [vmem:[%s535 + $0x8] sm:$0xff]
    %v538 = vld [vmem:[%s535 + $0x10] sm:$0xff]
    %v539 = vld [vmem:[%s535 + $0x18] sm:$0xff]
    %v540 = vld [vmem:[%s535 + $0x20] sm:$0xff]
    %v541 = vld [vmem:[%s535 + $0x28] sm:$0xff]
    %v542 = vld [vmem:[%s535 + $0x30] sm:$0xff]
    %v543 = vld [vmem:[%s535 + $0x38] sm:$0xff]
    %v544 = vld [vmem:[%s535 + $0x40] sm:$0xff]
    %v545 = vld [vmem:[%s535 + $0x48] sm:$0xff]
    %v546 = vld [vmem:[%s535 + $0x50] sm:$0xff]
    %v547 = vld [vmem:[%s535 + $0x58] sm:$0xff]
    %v548 = vld [vmem:[%s535 + $0x60] sm:$0xff]
    %v549 = vld [vmem:[%s535 + $0x68] sm:$0xff]
    %v550 = vld [vmem:[%s535 + $0x70] sm:$0xff]
    %v551 = vld [vmem:[%s535 + $0x78] sm:$0xff]
    %s552 = scalar_lea.vmem %s3, 5
    %v553 = vld [vmem:[%s552] sm:$0x1]
    %v555 = vlaneseq
    %v556 = vshrl.u32 %v555, 7
    %v557 = vsub.s32 0, %v556
    %v558 = vrot.slane %v553, %v557
    %560 = vmatprep.subr.mxu0 0.0
    %561 = vmatpush1.msra.mxu0 %v536
    %562 = vmatprep.subr.mxu0 0.0
    %563 = vmatpush1.msra.mxu0 %v537
    %564 = vmatprep.subr.mxu0 0.0
    %565 = vmatpush1.msra.mxu0 %v538
    %566 = vmatprep.subr.mxu0 0.0
    %567 = vmatpush1.msra.mxu0 %v539
    %568 = vmatprep.subr.mxu0 0.0
    %569 = vmatpush1.msra.mxu0 %v540
    %570 = vmatprep.subr.mxu0 0.0
    %571 = vmatpush1.msra.mxu0 %v541
    %572 = vmatprep.subr.mxu0 0.0
    %573 = vmatpush1.msra.mxu0 %v542
    %574 = vmatprep.subr.mxu0 0.0
    %575 = vmatpush1.msra.mxu0 %v543
    %576 = vmatprep.subr.mxu0 0.0
    %577 = vmatpush1.msra.mxu0 %v544
    %578 = vmatprep.subr.mxu0 0.0
    %579 = vmatpush1.msra.mxu0 %v545
    %580 = vmatprep.subr.mxu0 0.0
    %581 = vmatpush1.msra.mxu0 %v546
    %582 = vmatprep.subr.mxu0 0.0
    %583 = vmatpush1.msra.mxu0 %v547
    %584 = vmatprep.subr.mxu0 0.0
    %585 = vmatpush1.msra.mxu0 %v548
    %586 = vmatprep.subr.mxu0 0.0
    %587 = vmatpush1.msra.mxu0 %v549
    %588 = vmatprep.subr.mxu0 0.0
    %589 = vmatpush1.msra.mxu0 %v550
    %590 = vmatprep.subr.mxu0 0.0
    %591 = vmatpush1.msra.mxu0 %v551
    %592 = vmatprep.subr.mxu0 0.0
    %593 = vmatpush1.msra.mxu0 0.0
    %594 = vmatprep.subr.mxu0 0.0
    %595 = vmatpush1.msra.mxu0 0.0
    %596 = vmatprep.subr.mxu0 0.0
    %597 = vmatpush1.msra.mxu0 0.0
    %598 = vmatprep.subr.mxu0 0.0
    %599 = vmatpush1.msra.mxu0 0.0
    %600 = vmatprep.subr.mxu0 0.0
    %601 = vmatpush1.msra.mxu0 0.0
    %602 = vmatprep.subr.mxu0 0.0
    %603 = vmatpush1.msra.mxu0 0.0
    %604 = vmatprep.subr.mxu0 0.0
    %605 = vmatpush1.msra.mxu0 0.0
    %606 = vmatprep.subr.mxu0 0.0
    %607 = vmatpush1.msra.mxu0 0.0
    %608 = vmatprep.subr.mxu0 0.0
    %609 = vmatpush1.msra.mxu0 0.0
    %610 = vmatprep.subr.mxu0 0.0
    %611 = vmatpush1.msra.mxu0 0.0
    %612 = vmatprep.subr.mxu0 0.0
    %613 = vmatpush1.msra.mxu0 0.0
    %614 = vmatprep.subr.mxu0 0.0
    %615 = vmatpush1.msra.mxu0 0.0
    %616 = vmatprep.subr.mxu0 0.0
    %617 = vmatpush1.msra.mxu0 0.0
    %618 = vmatprep.subr.mxu0 0.0
    %619 = vmatpush1.msra.mxu0 0.0
    %620 = vmatprep.subr.mxu0 0.0
    %621 = vmatpush1.msra.mxu0 0.0
    %622 = vmatprep.subr.mxu0 0.0
    %623 = vmatpush1.msra.mxu0 0.0
    %624 = vmatprep.mubr.f32.mxu0 0.0
    %625 = vmatmul.mubr.f32.gmra.mrb[0].mxu0 %v534
    %v626 = vpop.f32.mrb[0].mxu0
    %v627 = vadd.f32 %v558, %v626
    %v628 = vpop.f32.mrb[0].mxu0
    %629 = vdwg.mxu0
    %v630 = vadd.f32 %v627, %v318
    %631 = vst [vmem:[%s4] sm:$0xff] %v630
    // Predicated region
    $region22: #{vae_forward.1} parent=1 // pred_check
      _
    $region23: #{vae_forward.1} parent=1 // pred_check_branch
      %633 = sbr.rel (0) target = $region25
    $region24: #{vae_forward.1} parent=1 // pred_region
      _
    $region25: #{vae_forward.1} parent=1 // pred_fallthru
      _
    // Predicated region
    $region26: #{vae_forward.1} parent=1 // pred_check
      _
    $region27: #{vae_forward.1} parent=1 // pred_check_branch
      %635 = sbr.rel (0) target = $region29
    $region28: #{vae_forward.1} parent=1 // pred_region
      _
    $region29: #{vae_forward.1} parent=1 // pred_fallthru
      _
    %636 = vsyncpa [#allocation5], 1

</llo_original>
